<compile_context>
chip_gen: v5e
topology: v5e:2x2
jax: 0.10.0
libtpu: 0.0.40
codegen_flags: <defaults>
</compile_context>

<pallas_src>
import functools

import jax
import jax.numpy as jnp
from jax.experimental import pallas as pl
from jax.experimental.pallas import tpu as pltpu

LANE = 128         # TPU lane width; all feature dims are zero-padded to this.
SUBLANE_BF16 = 16  # bf16 sublane tile: batch tiles must be a multiple of 16.
BT_MAX = 1024      # (1024, 128) bf16 activation tile = 256 KiB; ~0.5 MiB double-buffered.


def _round_up(n, m):
    return ((n + m - 1) // m) * m


def make_cinn_kernel(num_layers, input_size, condition_size, output_size, F):
    """Fused encoder+decoder kernel; num_layers+1 linears per stack.

    w_ref: (2*(num_layers+1), F, F) bf16  (encoder layers first, then decoder).
    b_ref: (2*(num_layers+1), 1, F) f32.
    """
    n_lin = num_layers + 1
    shift = (output_size - input_size) % F  # lanes c must move by to sit after latent

    def kernel(xc_ref, w_ref, b_ref, out_ref):
        def stack(h, base):
            # num_layers x (Linear + ReLU) then one final Linear (no ReLU); f32 accum.
            for l in range(num_layers):
                z = (jnp.dot(h, w_ref[base + l], preferred_element_type=jnp.float32)
                     + b_ref[base + l])
                h = jnp.maximum(z, 0.0).astype(jnp.bfloat16)
            return (jnp.dot(h, w_ref[base + num_layers],
                            preferred_element_type=jnp.float32)
                    + b_ref[base + num_layers])

        h0 = xc_ref[...]        # bf16: x in lanes [0, in), c in lanes [in, in+cond)
        latent = stack(h0, 0)   # f32; lanes >= output_size are exactly 0 (padded enc W/b)

        # Rebuild the decoder's condition lanes from xc instead of streaming a second
        # (bt, F) tensor from HBM: roll c into lanes [out, out+cond) and lane-mask.
        cond = h0.astype(jnp.float32)
        if shift:
            cond = pltpu.roll(cond, shift, 1)
        lane = jax.lax.broadcasted_iota(jnp.int32, cond.shape, 1)
        cond = jnp.where((lane >= output_size) & (lane < output_size + condition_size),
                         cond, 0.0)

        # cat(latent, c) in the padded layout == latent + cond (disjoint nonzero lanes).
        aug = (latent + cond).astype(jnp.bfloat16)
        out = stack(aug, n_lin)
        out_ref[...] = out.astype(out_ref.dtype)

    return kernel


def pack_cinn_params(enc_params, dec_params, output_size, F):
    """Pack both stacks once (at init) into a zero-padded bf16 weight slab
    (2*(L+1), F, F) and an f32 bias slab (2*(L+1), 1, F).

    INVARIANT: the encoder's final weight/bias columns >= output_size MUST stay zero
    (they are, via the zero padding below, and bf16(0) == 0 exactly).  This guarantees
    latent's padded lanes are exactly 0, making the in-kernel `latent + cond` equal to
    cat(latent, c)."""
    assert enc_params[-2].shape[1] == output_size
    assert enc_params[-1].shape[-1] == output_size
    ws, bs = [], []
    for params in (enc_params, dec_params):
        for w, b in zip(params[0::2], params[1::2]):
            wp = jnp.zeros((F, F), jnp.float32).at[: w.shape[0], : w.shape[1]].set(w)
            bp = jnp.zeros((1, F), jnp.float32).at[:, : b.shape[-1]].set(b.reshape(1, -1))
            ws.append(wp)
            bs.append(bp)
    return jnp.stack(ws).astype(jnp.bfloat16), jnp.stack(bs)


@functools.partial(
    jax.jit,
    static_argnames=("num_layers", "input_size", "condition_size", "output_size"))
def cinn_forward(x, c, w_slab, b_slab, *, num_layers, input_size, condition_size,
                 output_size):
    """CINN forward via one pallas_call with a parallel batch grid."""
    batch = x.shape[0]
    in0 = input_size + condition_size
    F = w_slab.shape[-1]

    # Batch tiling: balanced tiles capped at BT_MAX, and >=2 grid steps whenever the
    # batch allows so v7x can shard the parallel batch axis across both TensorCores.
    min_steps = 2 if batch >= 2 * SUBLANE_BF16 else 1
    steps = max(min_steps, pl.cdiv(batch, BT_MAX))
    bt = _round_up(pl.cdiv(batch, steps), SUBLANE_BF16)
    b_pad = _round_up(batch, bt)
    grid = (b_pad // bt,)

    # Lane-dense, zero-padded cat(x, c), streamed as bf16 (halves activation DMA).
    xc = jnp.zeros((b_pad, F), jnp.float32)
    xc = xc.at[:batch, :input_size].set(x)
    xc = xc.at[:batch, input_size:in0].set(c)
    xc = xc.astype(jnp.bfloat16)

    kernel = make_cinn_kernel(num_layers, input_size, condition_size, output_size, F)

    act_spec = pl.BlockSpec((bt, F), lambda i: (i, 0))
    # Constant index_maps keep the (tiny) slabs VMEM-resident across the whole grid.
    # At F=128 they are <0.5 MiB even double-buffered; if F ever grows large on v7x
    # (64 MiB VMEM), mark these pipeline_mode=pl.Buffered(1) to drop the second buffer.
    w_spec = pl.BlockSpec(w_slab.shape, lambda i: (0, 0, 0))
    b_spec = pl.BlockSpec(b_slab.shape, lambda i: (0, 0, 0))

    out = pl.pallas_call(
        kernel,
        out_shape=jax.ShapeDtypeStruct((b_pad, F), jnp.float32),
        grid=grid,
        in_specs=[act_spec, w_spec, b_spec],
        out_specs=pl.BlockSpec((bt, F), lambda i: (i, 0)),
        compiler_params=pltpu.CompilerParams(dimension_semantics=("parallel",)),
    )(xc, w_slab, b_slab)

    return out[:batch, :output_size]


def init_stack_params(key, in0, hidden, num_layers, out):
    """Deterministic params for one stack: [W0,b0,...,Wout,bout], W in (in,out) layout.
    (W0 is the merged weight acting on the concatenated input.)"""
    dims = [(in0, hidden)] + [(hidden, hidden)] * (num_layers - 1) + [(hidden, out)]
    keys = jax.random.split(key, 2 * len(dims))
    params = []
    for i, (fi, fo) in enumerate(dims):
        bound = 1.0 / jnp.sqrt(jnp.float32(fi))
        w = jax.random.uniform(keys[2 * i], (fi, fo), jnp.float32, -bound, bound)
        b = jax.random.uniform(keys[2 * i + 1], (fo,), jnp.float32, -bound, bound)
        params += [w, b]
    return params


def reference_forward(x, c, enc, dec, num_layers, compute_dtype=jnp.float32):
    """Pure-JAX reference matching the PyTorch module.  compute_dtype=bfloat16 mirrors
    the kernel's dtype flow (bf16 matmul operands, f32 accumulation / bias / ReLU)."""
    def stack(inp, p):
        h = inp.astype(compute_dtype)
        n = num_layers + 1
        for i in range(n):
            z = (jnp.dot(h, p[2 * i].astype(compute_dtype),
                         preferred_element_type=jnp.float32) + p[2 * i + 1])
            h = jnp.maximum(z, 0.0).astype(compute_dtype) if i < n - 1 else z
        return h
    latent = stack(jnp.concatenate([x, c], axis=1), enc)
    return stack(jnp.concatenate([latent, c], axis=1), dec)


if __name__ == "__main__":
    batch = 8
    input_size = 16
    condition_size = 8
    hidden_size = 32
    num_layers = 3
    output_size = 16

    root = jax.random.PRNGKey(0)
    kx, kc, kenc, kdec = jax.random.split(root, 4)

    x = jax.random.normal(kx, (batch, input_size), jnp.float32)
    c = jax.random.normal(kc, (batch, condition_size), jnp.float32)

    enc_params = init_stack_params(kenc, input_size + condition_size,
                                   hidden_size, num_layers, output_size)
    dec_params = init_stack_params(kdec, output_size + condition_size,
                                   hidden_size, num_layers, output_size)

    # Pack once at init (hoisted out of the forward hot path).
    F = _round_up(max(input_size + condition_size, output_size + condition_size,
                      hidden_size, output_size), LANE)
    w_slab, b_slab = pack_cinn_params(enc_params, dec_params, output_size, F)

    out = cinn_forward(x, c, w_slab, b_slab,
                       num_layers=num_layers, input_size=input_size,
                       condition_size=condition_size, output_size=output_size)
    out = jax.block_until_ready(out)

    ref_bf16 = reference_forward(x, c, enc_params, dec_params, num_layers,
                                 compute_dtype=jnp.bfloat16)
    ref_f32 = reference_forward(x, c, enc_params, dec_params, num_layers,
                                compute_dtype=jnp.float32)

    assert out.shape == (batch, output_size)
    assert jnp.allclose(out, ref_bf16, atol=1e-2, rtol=1e-2), \
        "Pallas kernel mismatch vs bf16-matched JAX reference"
    assert jnp.allclose(out, ref_f32, atol=1e-1, rtol=1e-1), \
        "Pallas kernel mismatch vs f32 JAX reference"

    print("KERNEL_OK")
</pallas_src>

<mosaic_0001>
module attributes {stable_mosaic.version = 11 : i64} {
  func.func @kernel(%arg0: i32, %arg1: memref<16x128xbf16, #tpu.memory_space<vmem>>, %arg2: memref<8x128x128xbf16, #tpu.memory_space<vmem>>, %arg3: memref<8x1x128xf32, #tpu.memory_space<vmem>>, %arg4: memref<16x128xf32, #tpu.memory_space<vmem>>) attributes {dimension_semantics = [#tpu.dimension_semantics<parallel>], iteration_bounds = array<i64: 1>, scalar_prefetch = 0 : i64, scratch_operands = 0 : i64, tpu.core_type = #tpu.core_type<tc>, window_params = [{transform_indices = @transform_0, window_bounds = array<i64: 16, 128>}, {pipeline_mode = #tpu.pipeline_mode<synchronous>, transform_indices = @transform_1, window_bounds = array<i64: 8, 128, 128>}, {pipeline_mode = #tpu.pipeline_mode<synchronous>, transform_indices = @transform_2, window_bounds = array<i64: 8, 1, 128>}, {transform_indices = @transform_3, window_bounds = array<i64: 16, 128>}]} {
    %c0 = arith.constant 0 : index
    %c0_0 = arith.constant 0 : index
    %0 = vector.load %arg1[%c0, %c0_0] : memref<16x128xbf16, #tpu.memory_space<vmem>>, vector<16x128xbf16>
    %c0_1 = arith.constant 0 : index
    %c0_2 = arith.constant 0 : index
    %c0_3 = arith.constant 0 : index
    %1 = vector.load %arg2[%c0_1, %c0_2, %c0_3] : memref<8x128x128xbf16, #tpu.memory_space<vmem>>, vector<1x128x128xbf16>
    %2 = vector.shape_cast %1 : vector<1x128x128xbf16> to vector<128x128xbf16>
    %cst = arith.constant dense<0.000000e+00> : vector<16x128xf32>
    %3 = tpu.matmul %0, %2, %cst {dimension_numbers = #tpu.dot_dimension_numbers<[1], [0], [0], [1], [0, 0, 1, 1], [], []>} : vector<16x128xbf16>, vector<128x128xbf16>, vector<16x128xf32> -> vector<16x128xf32>
    %c0_4 = arith.constant 0 : index
    %c0_5 = arith.constant 0 : index
    %c0_6 = arith.constant 0 : index
    %4 = vector.load %arg3[%c0_4, %c0_5, %c0_6] : memref<8x1x128xf32, #tpu.memory_space<vmem>>, vector<1x1x128xf32>
    %5 = vector.shape_cast %4 : vector<1x1x128xf32> to vector<1x128xf32>
    %6 = vector.broadcast %5 : vector<1x128xf32> to vector<16x128xf32>
    %7 = arith.addf %3, %6 : vector<16x128xf32>
    %cst_7 = arith.constant 0.000000e+00 : f32
    %8 = vector.broadcast %cst_7 : f32 to vector<16x128xf32>
    %9 = arith.maximumf %7, %8 : vector<16x128xf32>
    %10 = arith.truncf %9 : vector<16x128xf32> to vector<16x128xbf16>
    %c1 = arith.constant 1 : index
    %c0_8 = arith.constant 0 : index
    %c0_9 = arith.constant 0 : index
    %11 = vector.load %arg2[%c1, %c0_8, %c0_9] : memref<8x128x128xbf16, #tpu.memory_space<vmem>>, vector<1x128x128xbf16>
    %12 = vector.shape_cast %11 : vector<1x128x128xbf16> to vector<128x128xbf16>
    %cst_10 = arith.constant dense<0.000000e+00> : vector<16x128xf32>
    %13 = tpu.matmul %10, %12, %cst_10 {dimension_numbers = #tpu.dot_dimension_numbers<[1], [0], [0], [1], [0, 0, 1, 1], [], []>} : vector<16x128xbf16>, vector<128x128xbf16>, vector<16x128xf32> -> vector<16x128xf32>
    %c1_11 = arith.constant 1 : index
    %c0_12 = arith.constant 0 : index
    %c0_13 = arith.constant 0 : index
    %14 = vector.load %arg3[%c1_11, %c0_12, %c0_13] : memref<8x1x128xf32, #tpu.memory_space<vmem>>, vector<1x1x128xf32>
    %15 = vector.shape_cast %14 : vector<1x1x128xf32> to vector<1x128xf32>
    %16 = vector.broadcast %15 : vector<1x128xf32> to vector<16x128xf32>
    %17 = arith.addf %13, %16 : vector<16x128xf32>
    %cst_14 = arith.constant 0.000000e+00 : f32
    %18 = vector.broadcast %cst_14 : f32 to vector<16x128xf32>
    %19 = arith.maximumf %17, %18 : vector<16x128xf32>
    %20 = arith.truncf %19 : vector<16x128xf32> to vector<16x128xbf16>
    %c2 = arith.constant 2 : index
    %c0_15 = arith.constant 0 : index
    %c0_16 = arith.constant 0 : index
    %21 = vector.load %arg2[%c2, %c0_15, %c0_16] : memref<8x128x128xbf16, #tpu.memory_space<vmem>>, vector<1x128x128xbf16>
    %22 = vector.shape_cast %21 : vector<1x128x128xbf16> to vector<128x128xbf16>
    %cst_17 = arith.constant dense<0.000000e+00> : vector<16x128xf32>
    %23 = tpu.matmul %20, %22, %cst_17 {dimension_numbers = #tpu.dot_dimension_numbers<[1], [0], [0], [1], [0, 0, 1, 1], [], []>} : vector<16x128xbf16>, vector<128x128xbf16>, vector<16x128xf32> -> vector<16x128xf32>
    %c2_18 = arith.constant 2 : index
    %c0_19 = arith.constant 0 : index
    %c0_20 = arith.constant 0 : index
    %24 = vector.load %arg3[%c2_18, %c0_19, %c0_20] : memref<8x1x128xf32, #tpu.memory_space<vmem>>, vector<1x1x128xf32>
    %25 = vector.shape_cast %24 : vector<1x1x128xf32> to vector<1x128xf32>
    %26 = vector.broadcast %25 : vector<1x128xf32> to vector<16x128xf32>
    %27 = arith.addf %23, %26 : vector<16x128xf32>
    %cst_21 = arith.constant 0.000000e+00 : f32
    %28 = vector.broadcast %cst_21 : f32 to vector<16x128xf32>
    %29 = arith.maximumf %27, %28 : vector<16x128xf32>
    %30 = arith.truncf %29 : vector<16x128xf32> to vector<16x128xbf16>
    %c3 = arith.constant 3 : index
    %c0_22 = arith.constant 0 : index
    %c0_23 = arith.constant 0 : index
    %31 = vector.load %arg2[%c3, %c0_22, %c0_23] : memref<8x128x128xbf16, #tpu.memory_space<vmem>>, vector<1x128x128xbf16>
    %32 = vector.shape_cast %31 : vector<1x128x128xbf16> to vector<128x128xbf16>
    %cst_24 = arith.constant dense<0.000000e+00> : vector<16x128xf32>
    %33 = tpu.matmul %30, %32, %cst_24 {dimension_numbers = #tpu.dot_dimension_numbers<[1], [0], [0], [1], [0, 0, 1, 1], [], []>} : vector<16x128xbf16>, vector<128x128xbf16>, vector<16x128xf32> -> vector<16x128xf32>
    %c3_25 = arith.constant 3 : index
    %c0_26 = arith.constant 0 : index
    %c0_27 = arith.constant 0 : index
    %34 = vector.load %arg3[%c3_25, %c0_26, %c0_27] : memref<8x1x128xf32, #tpu.memory_space<vmem>>, vector<1x1x128xf32>
    %35 = vector.shape_cast %34 : vector<1x1x128xf32> to vector<1x128xf32>
    %36 = vector.broadcast %35 : vector<1x128xf32> to vector<16x128xf32>
    %37 = arith.addf %33, %36 : vector<16x128xf32>
    %38 = arith.extf %0 : vector<16x128xbf16> to vector<16x128xf32>
    %39 = tpu.iota {dimensions = array<i32: 1>} : vector<16x128xi32>
    %c16_i32 = arith.constant 16 : i32
    %40 = vector.broadcast %c16_i32 : i32 to vector<16x128xi32>
    %41 = arith.cmpi sge, %39, %40 : vector<16x128xi32>
    %c24_i32 = arith.constant 24 : i32
    %42 = vector.broadcast %c24_i32 : i32 to vector<16x128xi32>
    %43 = arith.cmpi slt, %39, %42 : vector<16x128xi32>
    %44 = arith.andi %41, %43 : vector<16x128xi1>
    %cst_28 = arith.constant 0.000000e+00 : f32
    %45 = vector.broadcast %cst_28 : f32 to vector<16x128xf32>
    %46 = arith.select %44, %38, %45 : vector<16x128xi1>, vector<16x128xf32>
    %47 = arith.addf %37, %46 : vector<16x128xf32>
    %48 = arith.truncf %47 : vector<16x128xf32> to vector<16x128xbf16>
    %c4 = arith.constant 4 : index
    %c0_29 = arith.constant 0 : index
    %c0_30 = arith.constant 0 : index
    %49 = vector.load %arg2[%c4, %c0_29, %c0_30] : memref<8x128x128xbf16, #tpu.memory_space<vmem>>, vector<1x128x128xbf16>
    %50 = vector.shape_cast %49 : vector<1x128x128xbf16> to vector<128x128xbf16>
    %cst_31 = arith.constant dense<0.000000e+00> : vector<16x128xf32>
    %51 = tpu.matmul %48, %50, %cst_31 {dimension_numbers = #tpu.dot_dimension_numbers<[1], [0], [0], [1], [0, 0, 1, 1], [], []>} : vector<16x128xbf16>, vector<128x128xbf16>, vector<16x128xf32> -> vector<16x128xf32>
    %c4_32 = arith.constant 4 : index
    %c0_33 = arith.constant 0 : index
    %c0_34 = arith.constant 0 : index
    %52 = vector.load %arg3[%c4_32, %c0_33, %c0_34] : memref<8x1x128xf32, #tpu.memory_space<vmem>>, vector<1x1x128xf32>
    %53 = vector.shape_cast %52 : vector<1x1x128xf32> to vector<1x128xf32>
    %54 = vector.broadcast %53 : vector<1x128xf32> to vector<16x128xf32>
    %55 = arith.addf %51, %54 : vector<16x128xf32>
    %cst_35 = arith.constant 0.000000e+00 : f32
    %56 = vector.broadcast %cst_35 : f32 to vector<16x128xf32>
    %57 = arith.maximumf %55, %56 : vector<16x128xf32>
    %58 = arith.truncf %57 : vector<16x128xf32> to vector<16x128xbf16>
    %c5 = arith.constant 5 : index
    %c0_36 = arith.constant 0 : index
    %c0_37 = arith.constant 0 : index
    %59 = vector.load %arg2[%c5, %c0_36, %c0_37] : memref<8x128x128xbf16, #tpu.memory_space<vmem>>, vector<1x128x128xbf16>
    %60 = vector.shape_cast %59 : vector<1x128x128xbf16> to vector<128x128xbf16>
    %cst_38 = arith.constant dense<0.000000e+00> : vector<16x128xf32>
    %61 = tpu.matmul %58, %60, %cst_38 {dimension_numbers = #tpu.dot_dimension_numbers<[1], [0], [0], [1], [0, 0, 1, 1], [], []>} : vector<16x128xbf16>, vector<128x128xbf16>, vector<16x128xf32> -> vector<16x128xf32>
    %c5_39 = arith.constant 5 : index
    %c0_40 = arith.constant 0 : index
    %c0_41 = arith.constant 0 : index
    %62 = vector.load %arg3[%c5_39, %c0_40, %c0_41] : memref<8x1x128xf32, #tpu.memory_space<vmem>>, vector<1x1x128xf32>
    %63 = vector.shape_cast %62 : vector<1x1x128xf32> to vector<1x128xf32>
    %64 = vector.broadcast %63 : vector<1x128xf32> to vector<16x128xf32>
    %65 = arith.addf %61, %64 : vector<16x128xf32>
    %cst_42 = arith.constant 0.000000e+00 : f32
    %66 = vector.broadcast %cst_42 : f32 to vector<16x128xf32>
    %67 = arith.maximumf %65, %66 : vector<16x128xf32>
    %68 = arith.truncf %67 : vector<16x128xf32> to vector<16x128xbf16>
    %c6 = arith.constant 6 : index
    %c0_43 = arith.constant 0 : index
    %c0_44 = arith.constant 0 : index
    %69 = vector.load %arg2[%c6, %c0_43, %c0_44] : memref<8x128x128xbf16, #tpu.memory_space<vmem>>, vector<1x128x128xbf16>
    %70 = vector.shape_cast %69 : vector<1x128x128xbf16> to vector<128x128xbf16>
    %cst_45 = arith.constant dense<0.000000e+00> : vector<16x128xf32>
    %71 = tpu.matmul %68, %70, %cst_45 {dimension_numbers = #tpu.dot_dimension_numbers<[1], [0], [0], [1], [0, 0, 1, 1], [], []>} : vector<16x128xbf16>, vector<128x128xbf16>, vector<16x128xf32> -> vector<16x128xf32>
    %c6_46 = arith.constant 6 : index
    %c0_47 = arith.constant 0 : index
    %c0_48 = arith.constant 0 : index
    %72 = vector.load %arg3[%c6_46, %c0_47, %c0_48] : memref<8x1x128xf32, #tpu.memory_space<vmem>>, vector<1x1x128xf32>
    %73 = vector.shape_cast %72 : vector<1x1x128xf32> to vector<1x128xf32>
    %74 = vector.broadcast %73 : vector<1x128xf32> to vector<16x128xf32>
    %75 = arith.addf %71, %74 : vector<16x128xf32>
    %cst_49 = arith.constant 0.000000e+00 : f32
    %76 = vector.broadcast %cst_49 : f32 to vector<16x128xf32>
    %77 = arith.maximumf %75, %76 : vector<16x128xf32>
    %78 = arith.truncf %77 : vector<16x128xf32> to vector<16x128xbf16>
    %c7 = arith.constant 7 : index
    %c0_50 = arith.constant 0 : index
    %c0_51 = arith.constant 0 : index
    %79 = vector.load %arg2[%c7, %c0_50, %c0_51] : memref<8x128x128xbf16, #tpu.memory_space<vmem>>, vector<1x128x128xbf16>
    %80 = vector.shape_cast %79 : vector<1x128x128xbf16> to vector<128x128xbf16>
    %cst_52 = arith.constant dense<0.000000e+00> : vector<16x128xf32>
    %81 = tpu.matmul %78, %80, %cst_52 {dimension_numbers = #tpu.dot_dimension_numbers<[1], [0], [0], [1], [0, 0, 1, 1], [], []>} : vector<16x128xbf16>, vector<128x128xbf16>, vector<16x128xf32> -> vector<16x128xf32>
    %c7_53 = arith.constant 7 : index
    %c0_54 = arith.constant 0 : index
    %c0_55 = arith.constant 0 : index
    %82 = vector.load %arg3[%c7_53, %c0_54, %c0_55] : memref<8x1x128xf32, #tpu.memory_space<vmem>>, vector<1x1x128xf32>
    %83 = vector.shape_cast %82 : vector<1x1x128xf32> to vector<1x128xf32>
    %84 = vector.broadcast %83 : vector<1x128xf32> to vector<16x128xf32>
    %85 = arith.addf %81, %84 : vector<16x128xf32>
    %c0_56 = arith.constant 0 : index
    %c0_57 = arith.constant 0 : index
    %86 = vector.load %arg4[%c0_56, %c0_57] : memref<16x128xf32, #tpu.memory_space<vmem>>, vector<16x128xf32>
    tpu.vector_store %arg4[%c0_56, %c0_57], %85 {strides = array<i32>} : memref<16x128xf32, #tpu.memory_space<vmem>>, vector<16x128xf32>,
    return
  }
  func.func @transform_0(%arg0: i32) -> (i32, i32) {
    %c0_i32 = arith.constant 0 : i32
    %c0_i32_0 = arith.constant 0 : i32
    return %arg0, %c0_i32 : i32, i32
  }
  func.func @transform_1(%arg0: i32) -> (i32, i32, i32) {
    %c0_i32 = arith.constant 0 : i32
    %c0_i32_0 = arith.constant 0 : i32
    %c0_i32_1 = arith.constant 0 : i32
    %c0_i32_2 = arith.constant 0 : i32
    return %c0_i32, %c0_i32_0, %c0_i32_1 : i32, i32, i32
  }
  func.func @transform_2(%arg0: i32) -> (i32, i32, i32) {
    %c0_i32 = arith.constant 0 : i32
    %c0_i32_0 = arith.constant 0 : i32
    %c0_i32_1 = arith.constant 0 : i32
    %c0_i32_2 = arith.constant 0 : i32
    return %c0_i32, %c0_i32_0, %c0_i32_1 : i32, i32, i32
  }
  func.func @transform_3(%arg0: i32) -> (i32, i32) {
    %c0_i32 = arith.constant 0 : i32
    %c0_i32_0 = arith.constant 0 : i32
    return %arg0, %c0_i32 : i32, i32
  }
}

</mosaic_0001>

<llo_original>
// kernel: cinn_forward.1
$region0: #{cinn_forward.1}
  #allocation0 [shape = 'u32[]', space=smem, size = 0x4, offset = 0x4, fixed_abs, tag = 'smem constant byte address 0x4 - core index']
  #allocation1 [shape = 'u32[72,128]{1,0:T(1,128)}', space=vmem, size = 0x9000, scoped, tag = 'internal scratch']
  %s0 = inlined_call_operand.vmem [shape: bf16[16,128], index: 0, kind: input, shape index: {}]
  %s1 = inlined_call_operand.hbm [shape: bf16[8,128,128], index: 1, kind: input, shape index: {}]
  %s2 = inlined_call_operand.vmem [shape: f32[8,1,128], index: 2, kind: input, shape index: {}]
  %s3 = inlined_call_operand.vmem [shape: f32[16,128], index: 3, kind: output, shape index: {}]
  %s4 = sld [smem:[#allocation0]]
  $region26: #{cinn_forward.1} parent=0
    _
  %s6 = ssub.s32 1, %s4
  %s7 = scalar_select 0, %s6, %s4
  $region1: #{cinn_forward.1} parent=0
    #allocation2 [shape = 'u8[262144]{0}', space=vmem, size = 0x40000, scoped, tag = 'input window, operand 1, single buffered']
    #allocation3 [shape = 's32[1]{0}', space=sflag, size = 0x4, scoped, tag = 'scoped memory for cinn_forward.1']
    %8 = vsyncpa [#allocation3], 0
    // Predicated region
    $region2: #{cinn_forward.1} parent=1 // pred_check
      _
    $region3: #{cinn_forward.1} parent=1 // pred_check_branch
      %10 = sbr.rel (0) target = $region5
    $region4: #{cinn_forward.1} parent=1 // pred_region
      _
    $region5: #{cinn_forward.1} parent=1 // pred_fallthru
      _
    // Predicated region
    $region6: #{cinn_forward.1} parent=1 // pred_check
      _
    $region7: #{cinn_forward.1} parent=1 // pred_check_branch
      %12 = sbr.rel (0) target = $region9
    $region8: #{cinn_forward.1} parent=1 // pred_region
      %14 = vsyncadd [#allocation3], 0
      %s15 = sshll.u32 %s1, 4
      %s16 = int_to_ptr.hbm [resolvable:$true] %s15
      %s17 = sshll.u32 [#allocation2], 4
      %s18 = int_to_ptr.vmem [resolvable:$true] %s17
      %23 = dma.hbm_to_vmem [thread:$0]  %s16, 8192, %s18, [#allocation3], 64, 64, 4
    $region9: #{cinn_forward.1} parent=1 // pred_fallthru
      _
    // Predicated region
    $region10: #{cinn_forward.1} parent=1 // pred_check
      _
    $region11: #{cinn_forward.1} parent=1 // pred_check_branch
      %25 = sbr.rel (0) target = $region13
    $region12: #{cinn_forward.1} parent=1 // pred_region
      _
    $region13: #{cinn_forward.1} parent=1 // pred_fallthru
      _
    // Predicated region
    $region14: #{cinn_forward.1} parent=1 // pred_check
      _
    $region15: #{cinn_forward.1} parent=1 // pred_check_branch
      %27 = sbr.rel (0) target = $region17
    $region16: #{cinn_forward.1} parent=1 // pred_region
      %29 = dma.done [#allocation3], 8192
    $region17: #{cinn_forward.1} parent=1 // pred_fallthru
      _
    %v30 = vld [vmem:[%s0] sm:$0xf]
    %v31 = vld [vmem:[%s0 + $0x4] sm:$0xf]
    %v32 = vld [vmem:[#allocation2] sm:$0xf]
    %v33 = vld [vmem:[#allocation2 + $0x4] sm:$0xf]
    %v34 = vld [vmem:[#allocation2 + $0x8] sm:$0xf]
    %v35 = vld [vmem:[#allocation2 + $0xc] sm:$0xf]
    %v36 = vld [vmem:[#allocation2 + $0x10] sm:$0xf]
    %v37 = vld [vmem:[#allocation2 + $0x14] sm:$0xf]
    %v38 = vld [vmem:[#allocation2 + $0x18] sm:$0xf]
    %v39 = vld [vmem:[#allocation2 + $0x1c] sm:$0xf]
    %v40 = vld [vmem:[#allocation2 + $0x20] sm:$0xf]
    %v41 = vld [vmem:[#allocation2 + $0x24] sm:$0xf]
    %v42 = vld [vmem:[#allocation2 + $0x28] sm:$0xf]
    %v43 = vld [vmem:[#allocation2 + $0x2c] sm:$0xf]
    %v44 = vld [vmem:[#allocation2 + $0x30] sm:$0xf]
    %v45 = vld [vmem:[#allocation2 + $0x34] sm:$0xf]
    %v46 = vld [vmem:[#allocation2 + $0x38] sm:$0xf]
    %v47 = vld [vmem:[#allocation2 + $0x3c] sm:$0xf]
    %v48 = vld [vmem:[%s2] sm:$0x1]
    %v50 = vperm.slane %v48, 0
    %v54 = vunpack.c.l.b16 %v30
    %v55 = vunpack.c.l.b16 %v31
    %v56 = vpack.c.b16 %v55, %v54
    %v74 = vunpack.c.l.b16 %v32
    %v75 = vunpack.c.l.b16 %v33
    %v76 = vunpack.c.l.b16 %v34
    %v77 = vunpack.c.l.b16 %v35
    %v78 = vunpack.c.l.b16 %v36
    %v79 = vunpack.c.l.b16 %v37
    %v80 = vunpack.c.l.b16 %v38
    %v81 = vunpack.c.l.b16 %v39
    %v82 = vunpack.c.l.b16 %v40
    %v83 = vunpack.c.l.b16 %v41
    %v84 = vunpack.c.l.b16 %v42
    %v85 = vunpack.c.l.b16 %v43
    %v86 = vunpack.c.l.b16 %v44
    %v87 = vunpack.c.l.b16 %v45
    %v88 = vunpack.c.l.b16 %v46
    %v89 = vunpack.c.l.b16 %v47
    %v90 = vpack.c.b16 %v75, %v74
    %v91 = vpack.c.b16 %v77, %v76
    %v92 = vpack.c.b16 %v79, %v78
    %v93 = vpack.c.b16 %v81, %v80
    %v94 = vpack.c.b16 %v83, %v82
    %v95 = vpack.c.b16 %v85, %v84
    %v96 = vpack.c.b16 %v87, %v86
    %v97 = vpack.c.b16 %v89, %v88
    %106 = vmatpush.bf16.msra.mxu0 %v97
    %107 = vmatpush.bf16.msra.mxu0 %v96
    %108 = vmatpush.bf16.msra.mxu0 %v95
    %109 = vmatpush.bf16.msra.mxu0 %v94
    %110 = vmatpush.bf16.msra.mxu0 %v93
    %111 = vmatpush.bf16.msra.mxu0 %v92
    %112 = vmatpush.bf16.msra.mxu0 %v91
    %113 = vmatpush.bf16.msra.mxu0 %v90
    %114 = vmatmul.bf16.gmra.mxu0 %v56
    %v115 = vpop.f32.mrf.mxu0
    %v116 = vadd.f32 %v50, %v115
    %v117 = vpop.f32.mrf.mxu0
    %v118 = vadd.f32 %v50, %v117
    %119 = vdwg.mxu0
    %v120 = vmax.f32 %v116, 0.0
    %v121 = vmax.f32 %v118, 0.0
    %v122 = vpack.c.bf16 %v121, %v120
    %s123 = scalar_lea.vmem [#allocation2], 64
    %v124 = vld [vmem:[%s123] sm:$0xf]
    %v125 = vld [vmem:[%s123 + $0x4] sm:$0xf]
    %v126 = vld [vmem:[%s123 + $0x8] sm:$0xf]
    %v127 = vld [vmem:[%s123 + $0xc] sm:$0xf]
    %v128 = vld [vmem:[%s123 + $0x10] sm:$0xf]
    %v129 = vld [vmem:[%s123 + $0x14] sm:$0xf]
    %v130 = vld [vmem:[%s123 + $0x18] sm:$0xf]
    %v131 = vld [vmem:[%s123 + $0x1c] sm:$0xf]
    %v132 = vld [vmem:[%s123 + $0x20] sm:$0xf]
    %v133 = vld [vmem:[%s123 + $0x24] sm:$0xf]
    %v134 = vld [vmem:[%s123 + $0x28] sm:$0xf]
    %v135 = vld [vmem:[%s123 + $0x2c] sm:$0xf]
    %v136 = vld [vmem:[%s123 + $0x30] sm:$0xf]
    %v137 = vld [vmem:[%s123 + $0x34] sm:$0xf]
    %v138 = vld [vmem:[%s123 + $0x38] sm:$0xf]
    %v139 = vld [vmem:[%s123 + $0x3c] sm:$0xf]
    %s140 = scalar_lea.vmem %s2, 1
    %v141 = vld [vmem:[%s140] sm:$0x1]
    %v143 = vperm.slane %v141, 0
    %v161 = vunpack.c.l.b16 %v124
    %v162 = vunpack.c.l.b16 %v125
    %v163 = vunpack.c.l.b16 %v126
    %v164 = vunpack.c.l.b16 %v127
    %v165 = vunpack.c.l.b16 %v128
    %v166 = vunpack.c.l.b16 %v129
    %v167 = vunpack.c.l.b16 %v130
    %v168 = vunpack.c.l.b16 %v131
    %v169 = vunpack.c.l.b16 %v132
    %v170 = vunpack.c.l.b16 %v133
    %v171 = vunpack.c.l.b16 %v134
    %v172 = vunpack.c.l.b16 %v135
    %v173 = vunpack.c.l.b16 %v136
    %v174 = vunpack.c.l.b16 %v137
    %v175 = vunpack.c.l.b16 %v138
    %v176 = vunpack.c.l.b16 %v139
    %v177 = vpack.c.b16 %v162, %v161
    %v178 = vpack.c.b16 %v164, %v163
    %v179 = vpack.c.b16 %v166, %v165
    %v180 = vpack.c.b16 %v168, %v167
    %v181 = vpack.c.b16 %v170, %v169
    %v182 = vpack.c.b16 %v172, %v171
    %v183 = vpack.c.b16 %v174, %v173
    %v184 = vpack.c.b16 %v176, %v175
    %193 = vmatpush.bf16.msra.mxu0 %v184
    %194 = vmatpush.bf16.msra.mxu0 %v183
    %195 = vmatpush.bf16.msra.mxu0 %v182
    %196 = vmatpush.bf16.msra.mxu0 %v181
    %197 = vmatpush.bf16.msra.mxu0 %v180
    %198 = vmatpush.bf16.msra.mxu0 %v179
    %199 = vmatpush.bf16.msra.mxu0 %v178
    %200 = vmatpush.bf16.msra.mxu0 %v177
    %201 = vmatmul.bf16.gmra.mxu0 %v122
    %v202 = vpop.f32.mrf.mxu0
    %v203 = vadd.f32 %v143, %v202
    %v204 = vpop.f32.mrf.mxu0
    %v205 = vadd.f32 %v143, %v204
    %206 = vdwg.mxu0
    %v207 = vmax.f32 %v203, 0.0
    %v208 = vmax.f32 %v205, 0.0
    %v209 = vpack.c.bf16 %v208, %v207
    %s210 = scalar_lea.vmem [#allocation2], 128
    %v211 = vld [vmem:[%s210] sm:$0xf]
    %v212 = vld [vmem:[%s210 + $0x4] sm:$0xf]
    %v213 = vld [vmem:[%s210 + $0x8] sm:$0xf]
    %v214 = vld [vmem:[%s210 + $0xc] sm:$0xf]
    %v215 = vld [vmem:[%s210 + $0x10] sm:$0xf]
    %v216 = vld [vmem:[%s210 + $0x14] sm:$0xf]
    %v217 = vld [vmem:[%s210 + $0x18] sm:$0xf]
    %v218 = vld [vmem:[%s210 + $0x1c] sm:$0xf]
    %v219 = vld [vmem:[%s210 + $0x20] sm:$0xf]
    %v220 = vld [vmem:[%s210 + $0x24] sm:$0xf]
    %v221 = vld [vmem:[%s210 + $0x28] sm:$0xf]
    %v222 = vld [vmem:[%s210 + $0x2c] sm:$0xf]
    %v223 = vld [vmem:[%s210 + $0x30] sm:$0xf]
    %v224 = vld [vmem:[%s210 + $0x34] sm:$0xf]
    %v225 = vld [vmem:[%s210 + $0x38] sm:$0xf]
    %v226 = vld [vmem:[%s210 + $0x3c] sm:$0xf]
    %s227 = scalar_lea.vmem %s2, 2
    %v228 = vld [vmem:[%s227] sm:$0x1]
    %v230 = vperm.slane %v228, 0
    %v248 = vunpack.c.l.b16 %v211
    %v249 = vunpack.c.l.b16 %v212
    %v250 = vunpack.c.l.b16 %v213
    %v251 = vunpack.c.l.b16 %v214
    %v252 = vunpack.c.l.b16 %v215
    %v253 = vunpack.c.l.b16 %v216
    %v254 = vunpack.c.l.b16 %v217
    %v255 = vunpack.c.l.b16 %v218
    %v256 = vunpack.c.l.b16 %v219
    %v257 = vunpack.c.l.b16 %v220
    %v258 = vunpack.c.l.b16 %v221
    %v259 = vunpack.c.l.b16 %v222
    %v260 = vunpack.c.l.b16 %v223
    %v261 = vunpack.c.l.b16 %v224
    %v262 = vunpack.c.l.b16 %v225
    %v263 = vunpack.c.l.b16 %v226
    %v264 = vpack.c.b16 %v249, %v248
    %v265 = vpack.c.b16 %v251, %v250
    %v266 = vpack.c.b16 %v253, %v252
    %v267 = vpack.c.b16 %v255, %v254
    %v268 = vpack.c.b16 %v257, %v256
    %v269 = vpack.c.b16 %v259, %v258
    %v270 = vpack.c.b16 %v261, %v260
    %v271 = vpack.c.b16 %v263, %v262
    %280 = vmatpush.bf16.msra.mxu0 %v271
    %281 = vmatpush.bf16.msra.mxu0 %v270
    %282 = vmatpush.bf16.msra.mxu0 %v269
    %283 = vmatpush.bf16.msra.mxu0 %v268
    %284 = vmatpush.bf16.msra.mxu0 %v267
    %285 = vmatpush.bf16.msra.mxu0 %v266
    %286 = vmatpush.bf16.msra.mxu0 %v265
    %287 = vmatpush.bf16.msra.mxu0 %v264
    %288 = vmatmul.bf16.gmra.mxu0 %v209
    %v289 = vpop.f32.mrf.mxu0
    %v290 = vadd.f32 %v230, %v289
    %v291 = vpop.f32.mrf.mxu0
    %v292 = vadd.f32 %v230, %v291
    %293 = vdwg.mxu0
    %v294 = vmax.f32 %v290, 0.0
    %v295 = vmax.f32 %v292, 0.0
    %v296 = vpack.c.bf16 %v295, %v294
    %s297 = scalar_lea.vmem [#allocation2], 192
    %v298 = vld [vmem:[%s297] sm:$0xf]
    %v299 = vld [vmem:[%s297 + $0x4] sm:$0xf]
    %v300 = vld [vmem:[%s297 + $0x8] sm:$0xf]
    %v301 = vld [vmem:[%s297 + $0xc] sm:$0xf]
    %v302 = vld [vmem:[%s297 + $0x10] sm:$0xf]
    %v303 = vld [vmem:[%s297 + $0x14] sm:$0xf]
    %v304 = vld [vmem:[%s297 + $0x18] sm:$0xf]
    %v305 = vld [vmem:[%s297 + $0x1c] sm:$0xf]
    %v306 = vld [vmem:[%s297 + $0x20] sm:$0xf]
    %v307 = vld [vmem:[%s297 + $0x24] sm:$0xf]
    %v308 = vld [vmem:[%s297 + $0x28] sm:$0xf]
    %v309 = vld [vmem:[%s297 + $0x2c] sm:$0xf]
    %v310 = vld [vmem:[%s297 + $0x30] sm:$0xf]
    %v311 = vld [vmem:[%s297 + $0x34] sm:$0xf]
    %v312 = vld [vmem:[%s297 + $0x38] sm:$0xf]
    %v313 = vld [vmem:[%s297 + $0x3c] sm:$0xf]
    %s314 = scalar_lea.vmem %s2, 3
    %v315 = vld [vmem:[%s314] sm:$0x1]
    %v317 = vperm.slane %v315, 0
    %v335 = vunpack.c.l.b16 %v298
    %v336 = vunpack.c.l.b16 %v299
    %v337 = vunpack.c.l.b16 %v300
    %v338 = vunpack.c.l.b16 %v301
    %v339 = vunpack.c.l.b16 %v302
    %v340 = vunpack.c.l.b16 %v303
    %v341 = vunpack.c.l.b16 %v304
    %v342 = vunpack.c.l.b16 %v305
    %v343 = vunpack.c.l.b16 %v306
    %v344 = vunpack.c.l.b16 %v307
    %v345 = vunpack.c.l.b16 %v308
    %v346 = vunpack.c.l.b16 %v309
    %v347 = vunpack.c.l.b16 %v310
    %v348 = vunpack.c.l.b16 %v311
    %v349 = vunpack.c.l.b16 %v312
    %v350 = vunpack.c.l.b16 %v313
    %v351 = vpack.c.b16 %v336, %v335
    %v352 = vpack.c.b16 %v338, %v337
    %v353 = vpack.c.b16 %v340, %v339
    %v354 = vpack.c.b16 %v342, %v341
    %v355 = vpack.c.b16 %v344, %v343
    %v356 = vpack.c.b16 %v346, %v345
    %v357 = vpack.c.b16 %v348, %v347
    %v358 = vpack.c.b16 %v350, %v349
    %367 = vmatpush.bf16.msra.mxu0 %v358
    %368 = vmatpush.bf16.msra.mxu0 %v357
    %369 = vmatpush.bf16.msra.mxu0 %v356
    %370 = vmatpush.bf16.msra.mxu0 %v355
    %371 = vmatpush.bf16.msra.mxu0 %v354
    %372 = vmatpush.bf16.msra.mxu0 %v353
    %373 = vmatpush.bf16.msra.mxu0 %v352
    %374 = vmatpush.bf16.msra.mxu0 %v351
    %375 = vmatmul.bf16.gmra.mxu0 %v296
    %v376 = vpop.f32.mrf.mxu0
    %v377 = vadd.f32 %v317, %v376
    %v378 = vpop.f32.mrf.mxu0
    %v379 = vadd.f32 %v317, %v378
    %380 = vdwg.mxu0
    %v381 = vunpack.c.l.bf16 %v30
    %v382 = vunpack.c.l.bf16 %v31
    %v383 = vlaneseq
    %v384 = vand.u32 %v383, 127
    %vm385 = vcmp.ge.s32.totalorder %v384, 16
    %vm386 = vcmp.lt.s32.totalorder %v384, 24
    %vm387 = vmand %vm385, %vm386
    %v388 = vsel %vm387, %v381, 0.0
    %v389 = vsel %vm387, %v382, 0.0
    %v390 = vadd.f32 %v377, %v388
    %v391 = vadd.f32 %v379, %v389
    %v392 = vpack.c.bf16 %v391, %v390
    %s393 = scalar_lea.vmem [#allocation2], 256
    %v394 = vld [vmem:[%s393] sm:$0xf]
    %v395 = vld [vmem:[%s393 + $0x4] sm:$0xf]
    %v396 = vld [vmem:[%s393 + $0x8] sm:$0xf]
    %v397 = vld [vmem:[%s393 + $0xc] sm:$0xf]
    %v398 = vld [vmem:[%s393 + $0x10] sm:$0xf]
    %v399 = vld [vmem:[%s393 + $0x14] sm:$0xf]
    %v400 = vld [vmem:[%s393 + $0x18] sm:$0xf]
    %v401 = vld [vmem:[%s393 + $0x1c] sm:$0xf]
    %v402 = vld [vmem:[%s393 + $0x20] sm:$0xf]
    %v403 = vld [vmem:[%s393 + $0x24] sm:$0xf]
    %v404 = vld [vmem:[%s393 + $0x28] sm:$0xf]
    %v405 = vld [vmem:[%s393 + $0x2c] sm:$0xf]
    %v406 = vld [vmem:[%s393 + $0x30] sm:$0xf]
    %v407 = vld [vmem:[%s393 + $0x34] sm:$0xf]
    %v408 = vld [vmem:[%s393 + $0x38] sm:$0xf]
    %v409 = vld [vmem:[%s393 + $0x3c] sm:$0xf]
    %s410 = scalar_lea.vmem %s2, 4
    %v411 = vld [vmem:[%s410] sm:$0x1]
    %v413 = vperm.slane %v411, 0
    %v431 = vunpack.c.l.b16 %v394
    %v432 = vunpack.c.l.b16 %v395
    %v433 = vunpack.c.l.b16 %v396
    %v434 = vunpack.c.l.b16 %v397
    %v435 = vunpack.c.l.b16 %v398
    %v436 = vunpack.c.l.b16 %v399
    %v437 = vunpack.c.l.b16 %v400
    %v438 = vunpack.c.l.b16 %v401
    %v439 = vunpack.c.l.b16 %v402
    %v440 = vunpack.c.l.b16 %v403
    %v441 = vunpack.c.l.b16 %v404
    %v442 = vunpack.c.l.b16 %v405
    %v443 = vunpack.c.l.b16 %v406
    %v444 = vunpack.c.l.b16 %v407
    %v445 = vunpack.c.l.b16 %v408
    %v446 = vunpack.c.l.b16 %v409
    %v447 = vpack.c.b16 %v432, %v431
    %v448 = vpack.c.b16 %v434, %v433
    %v449 = vpack.c.b16 %v436, %v435
    %v450 = vpack.c.b16 %v438, %v437
    %v451 = vpack.c.b16 %v440, %v439
    %v452 = vpack.c.b16 %v442, %v441
    %v453 = vpack.c.b16 %v444, %v443
    %v454 = vpack.c.b16 %v446, %v445
    %463 = vmatpush.bf16.msra.mxu0 %v454
    %464 = vmatpush.bf16.msra.mxu0 %v453
    %465 = vmatpush.bf16.msra.mxu0 %v452
    %466 = vmatpush.bf16.msra.mxu0 %v451
    %467 = vmatpush.bf16.msra.mxu0 %v450
    %468 = vmatpush.bf16.msra.mxu0 %v449
    %469 = vmatpush.bf16.msra.mxu0 %v448
    %470 = vmatpush.bf16.msra.mxu0 %v447
    %471 = vmatmul.bf16.gmra.mxu0 %v392
    %v472 = vpop.f32.mrf.mxu0
    %v473 = vadd.f32 %v413, %v472
    %v474 = vpop.f32.mrf.mxu0
    %v475 = vadd.f32 %v413, %v474
    %476 = vdwg.mxu0
    %v477 = vmax.f32 %v473, 0.0
    %v478 = vmax.f32 %v475, 0.0
    %v479 = vpack.c.bf16 %v478, %v477
    %s480 = scalar_lea.vmem [#allocation2], 320
    %v481 = vld [vmem:[%s480] sm:$0xf]
    %v482 = vld [vmem:[%s480 + $0x4] sm:$0xf]
    %v483 = vld [vmem:[%s480 + $0x8] sm:$0xf]
    %v484 = vld [vmem:[%s480 + $0xc] sm:$0xf]
    %v485 = vld [vmem:[%s480 + $0x10] sm:$0xf]
    %v486 = vld [vmem:[%s480 + $0x14] sm:$0xf]
    %v487 = vld [vmem:[%s480 + $0x18] sm:$0xf]
    %v488 = vld [vmem:[%s480 + $0x1c] sm:$0xf]
    %v489 = vld [vmem:[%s480 + $0x20] sm:$0xf]
    %v490 = vld [vmem:[%s480 + $0x24] sm:$0xf]
    %v491 = vld [vmem:[%s480 + $0x28] sm:$0xf]
    %v492 = vld [vmem:[%s480 + $0x2c] sm:$0xf]
    %v493 = vld [vmem:[%s480 + $0x30] sm:$0xf]
    %v494 = vld [vmem:[%s480 + $0x34] sm:$0xf]
    %v495 = vld [vmem:[%s480 + $0x38] sm:$0xf]
    %v496 = vld [vmem:[%s480 + $0x3c] sm:$0xf]
    %s497 = scalar_lea.vmem %s2, 5
    %v498 = vld [vmem:[%s497] sm:$0x1]
    %v500 = vperm.slane %v498, 0
    %v518 = vunpack.c.l.b16 %v481
    %v519 = vunpack.c.l.b16 %v482
    %v520 = vunpack.c.l.b16 %v483
    %v521 = vunpack.c.l.b16 %v484
    %v522 = vunpack.c.l.b16 %v485
    %v523 = vunpack.c.l.b16 %v486
    %v524 = vunpack.c.l.b16 %v487
    %v525 = vunpack.c.l.b16 %v488
    %v526 = vunpack.c.l.b16 %v489
    %v527 = vunpack.c.l.b16 %v490
    %v528 = vunpack.c.l.b16 %v491
    %v529 = vunpack.c.l.b16 %v492
    %v530 = vunpack.c.l.b16 %v493
    %v531 = vunpack.c.l.b16 %v494
    %v532 = vunpack.c.l.b16 %v495
    %v533 = vunpack.c.l.b16 %v496
    %v534 = vpack.c.b16 %v519, %v518
    %v535 = vpack.c.b16 %v521, %v520
    %v536 = vpack.c.b16 %v523, %v522
    %v537 = vpack.c.b16 %v525, %v524
    %v538 = vpack.c.b16 %v527, %v526
    %v539 = vpack.c.b16 %v529, %v528
    %v540 = vpack.c.b16 %v531, %v530
    %v541 = vpack.c.b16 %v533, %v532
    %550 = vmatpush.bf16.msra.mxu0 %v541
    %551 = vmatpush.bf16.msra.mxu0 %v540
    %552 = vmatpush.bf16.msra.mxu0 %v539
    %553 = vmatpush.bf16.msra.mxu0 %v538
    %554 = vmatpush.bf16.msra.mxu0 %v537
    %555 = vmatpush.bf16.msra.mxu0 %v536
    %556 = vmatpush.bf16.msra.mxu0 %v535
    %557 = vmatpush.bf16.msra.mxu0 %v534
    %558 = vmatmul.bf16.gmra.mxu0 %v479
    %v559 = vpop.f32.mrf.mxu0
    %v560 = vadd.f32 %v500, %v559
    %v561 = vpop.f32.mrf.mxu0
    %v562 = vadd.f32 %v500, %v561
    %563 = vdwg.mxu0
    %v564 = vmax.f32 %v560, 0.0
    %v565 = vmax.f32 %v562, 0.0
    %v566 = vpack.c.bf16 %v565, %v564
    %s567 = scalar_lea.vmem [#allocation2], 384
    %v568 = vld [vmem:[%s567] sm:$0xf]
    %v569 = vld [vmem:[%s567 + $0x4] sm:$0xf]
    %v570 = vld [vmem:[%s567 + $0x8] sm:$0xf]
    %v571 = vld [vmem:[%s567 + $0xc] sm:$0xf]
    %v572 = vld [vmem:[%s567 + $0x10] sm:$0xf]
    %v573 = vld [vmem:[%s567 + $0x14] sm:$0xf]
    %v574 = vld [vmem:[%s567 + $0x18] sm:$0xf]
    %v575 = vld [vmem:[%s567 + $0x1c] sm:$0xf]
    %v576 = vld [vmem:[%s567 + $0x20] sm:$0xf]
    %v577 = vld [vmem:[%s567 + $0x24] sm:$0xf]
    %v578 = vld [vmem:[%s567 + $0x28] sm:$0xf]
    %v579 = vld [vmem:[%s567 + $0x2c] sm:$0xf]
    %v580 = vld [vmem:[%s567 + $0x30] sm:$0xf]
    %v581 = vld [vmem:[%s567 + $0x34] sm:$0xf]
    %v582 = vld [vmem:[%s567 + $0x38] sm:$0xf]
    %v583 = vld [vmem:[%s567 + $0x3c] sm:$0xf]
    %s584 = scalar_lea.vmem %s2, 6
    %v585 = vld [vmem:[%s584] sm:$0x1]
    %v587 = vperm.slane %v585, 0
    %v605 = vunpack.c.l.b16 %v568
    %v606 = vunpack.c.l.b16 %v569
    %v607 = vunpack.c.l.b16 %v570
    %v608 = vunpack.c.l.b16 %v571
    %v609 = vunpack.c.l.b16 %v572
    %v610 = vunpack.c.l.b16 %v573
    %v611 = vunpack.c.l.b16 %v574
    %v612 = vunpack.c.l.b16 %v575
    %v613 = vunpack.c.l.b16 %v576
    %v614 = vunpack.c.l.b16 %v577
    %v615 = vunpack.c.l.b16 %v578
    %v616 = vunpack.c.l.b16 %v579
    %v617 = vunpack.c.l.b16 %v580
    %v618 = vunpack.c.l.b16 %v581
    %v619 = vunpack.c.l.b16 %v582
    %v620 = vunpack.c.l.b16 %v583
    %v621 = vpack.c.b16 %v606, %v605
    %v622 = vpack.c.b16 %v608, %v607
    %v623 = vpack.c.b16 %v610, %v609
    %v624 = vpack.c.b16 %v612, %v611
    %v625 = vpack.c.b16 %v614, %v613
    %v626 = vpack.c.b16 %v616, %v615
    %v627 = vpack.c.b16 %v618, %v617
    %v628 = vpack.c.b16 %v620, %v619
    %637 = vmatpush.bf16.msra.mxu0 %v628
    %638 = vmatpush.bf16.msra.mxu0 %v627
    %639 = vmatpush.bf16.msra.mxu0 %v626
    %640 = vmatpush.bf16.msra.mxu0 %v625
    %641 = vmatpush.bf16.msra.mxu0 %v624
    %642 = vmatpush.bf16.msra.mxu0 %v623
    %643 = vmatpush.bf16.msra.mxu0 %v622
    %644 = vmatpush.bf16.msra.mxu0 %v621
    %645 = vmatmul.bf16.gmra.mxu0 %v566
    %v646 = vpop.f32.mrf.mxu0
    %v647 = vadd.f32 %v587, %v646
    %v648 = vpop.f32.mrf.mxu0
    %v649 = vadd.f32 %v587, %v648
    %650 = vdwg.mxu0
    %v651 = vmax.f32 %v647, 0.0
    %v652 = vmax.f32 %v649, 0.0
    %v653 = vpack.c.bf16 %v652, %v651
    %s654 = scalar_lea.vmem [#allocation2], 448
    %v655 = vld [vmem:[%s654] sm:$0xf]
    %v656 = vld [vmem:[%s654 + $0x4] sm:$0xf]
    %v657 = vld [vmem:[%s654 + $0x8] sm:$0xf]
    %v658 = vld [vmem:[%s654 + $0xc] sm:$0xf]
    %v659 = vld [vmem:[%s654 + $0x10] sm:$0xf]
    %v660 = vld [vmem:[%s654 + $0x14] sm:$0xf]
    %v661 = vld [vmem:[%s654 + $0x18] sm:$0xf]
    %v662 = vld [vmem:[%s654 + $0x1c] sm:$0xf]
    %v663 = vld [vmem:[%s654 + $0x20] sm:$0xf]
    %v664 = vld [vmem:[%s654 + $0x24] sm:$0xf]
    %v665 = vld [vmem:[%s654 + $0x28] sm:$0xf]
    %v666 = vld [vmem:[%s654 + $0x2c] sm:$0xf]
    %v667 = vld [vmem:[%s654 + $0x30] sm:$0xf]
    %v668 = vld [vmem:[%s654 + $0x34] sm:$0xf]
    %v669 = vld [vmem:[%s654 + $0x38] sm:$0xf]
    %v670 = vld [vmem:[%s654 + $0x3c] sm:$0xf]
    %s671 = scalar_lea.vmem %s2, 7
    %v672 = vld [vmem:[%s671] sm:$0x1]
    %v674 = vperm.slane %v672, 0
    %v692 = vunpack.c.l.b16 %v655
    %v693 = vunpack.c.l.b16 %v656
    %v694 = vunpack.c.l.b16 %v657
    %v695 = vunpack.c.l.b16 %v658
    %v696 = vunpack.c.l.b16 %v659
    %v697 = vunpack.c.l.b16 %v660
    %v698 = vunpack.c.l.b16 %v661
    %v699 = vunpack.c.l.b16 %v662
    %v700 = vunpack.c.l.b16 %v663
    %v701 = vunpack.c.l.b16 %v664
    %v702 = vunpack.c.l.b16 %v665
    %v703 = vunpack.c.l.b16 %v666
    %v704 = vunpack.c.l.b16 %v667
    %v705 = vunpack.c.l.b16 %v668
    %v706 = vunpack.c.l.b16 %v669
    %v707 = vunpack.c.l.b16 %v670
    %v708 = vpack.c.b16 %v693, %v692
    %v709 = vpack.c.b16 %v695, %v694
    %v710 = vpack.c.b16 %v697, %v696
    %v711 = vpack.c.b16 %v699, %v698
    %v712 = vpack.c.b16 %v701, %v700
    %v713 = vpack.c.b16 %v703, %v702
    %v714 = vpack.c.b16 %v705, %v704
    %v715 = vpack.c.b16 %v707, %v706
    %724 = vmatpush.bf16.msra.mxu0 %v715
    %725 = vmatpush.bf16.msra.mxu0 %v714
    %726 = vmatpush.bf16.msra.mxu0 %v713
    %727 = vmatpush.bf16.msra.mxu0 %v712
    %728 = vmatpush.bf16.msra.mxu0 %v711
    %729 = vmatpush.bf16.msra.mxu0 %v710
    %730 = vmatpush.bf16.msra.mxu0 %v709
    %731 = vmatpush.bf16.msra.mxu0 %v708
    %732 = vmatmul.bf16.gmra.mxu0 %v653
    %v733 = vpop.f32.mrf.mxu0
    %v734 = vadd.f32 %v674, %v733
    %v735 = vpop.f32.mrf.mxu0
    %v736 = vadd.f32 %v674, %v735
    %737 = vdwg.mxu0
    %738 = vst [vmem:[%s3] sm:$0xff] %v734
    %739 = vst [vmem:[%s3 + $0x8] sm:$0xff] %v736
    // Predicated region
    $region18: #{cinn_forward.1} parent=1 // pred_check
      _
    $region19: #{cinn_forward.1} parent=1 // pred_check_branch
      %741 = sbr.rel (0) target = $region21
    $region20: #{cinn_forward.1} parent=1 // pred_region
      _
    $region21: #{cinn_forward.1} parent=1 // pred_fallthru
      _
    // Predicated region
    $region22: #{cinn_forward.1} parent=1 // pred_check
      _
    $region23: #{cinn_forward.1} parent=1 // pred_check_branch
      %743 = sbr.rel (0) target = $region25
    $region24: #{cinn_forward.1} parent=1 // pred_region
      _
    $region25: #{cinn_forward.1} parent=1 // pred_fallthru
      _
    %744 = vsyncpa [#allocation3], 1

</llo_original>
